<compile_context>
chip_gen: v5e
topology: v5e:2x2
jax: 0.10.0
libtpu: 0.0.40
codegen_flags: <defaults>
</compile_context>

<pallas_src>
import math
from functools import partial

import jax
import jax.numpy as jnp
from jax import lax
from jax.experimental import pallas as pl
from jax.experimental.pallas import tpu as pltpu


def _qkv_attention_kernel(q_ref, k_ref, v_ref, o_ref, vt_ref, *,
                          scale_sq, t_valid, mm_dtype, exp_dtype, approx):
    # q_ref: (Hb, C, Tq); k_ref/v_ref: (Hb, C, Tk); o_ref: (Hb, C, Tq)
    # vt_ref: (Hb, Tk, C) VMEM scratch, persistent across query tiles.
    t = pl.program_id(2)
    hb, c, tq = q_ref.shape
    tk = k_ref.shape[2]

    # Transpose V once per (batch, head-block); resident across all query tiles.
    @pl.when(t == 0)
    def _():
        for hl in range(hb):
            vt_ref[hl] = jnp.transpose(v_ref[hl], (1, 0)).astype(mm_dtype)

    need_mask = (t_valid != tk)  # static
    if need_mask:
        key_mask = lax.broadcasted_iota(jnp.int32, (1, tk), 1) < t_valid  # [1, Tk]

    # Hoisted (JAX does not CSE broadcasts inside the unrolled head loop).
    ones_col = jnp.ones((tk, 1), dtype=mm_dtype)

    for hl in range(hb):
        # Small per-step transpose (O(C*Tq)) so the QK^T matmul is in native
        # [M,K]x[K,N] orientation; scale folded once into q.
        q_t = jnp.transpose(q_ref[hl], (1, 0)).astype(mm_dtype) * scale_sq  # [Tq, C]
        k = k_ref[hl].astype(mm_dtype)                                      # [C, Tk]

        s = lax.dot_general(q_t, k, (((1,), (0,)), ((), ())),
                            preferred_element_type=jnp.float32)             # [Tq, Tk] f32
        if need_mask:
            s = jnp.where(key_mask, s, -1e30)

        m = jnp.max(s, axis=-1, keepdims=True)                              # [Tq, 1] f32
        # bf16 exp on chips with a bf16 EUP (v6e/v7x); f32 exp otherwise.
        p = jnp.exp((s - m).astype(exp_dtype)).astype(mm_dtype)             # [Tq, Tk]

        # Softmax denominator via MXU matvec (f32 accumulation, no extra XLU
        # reduce pass); result is [Tq, 1] so it broadcasts over [Tq, C].
        l = lax.dot_general(p, ones_col, (((1,), (0,)), ((), ())),
                            preferred_element_type=jnp.float32)             # [Tq, 1] f32

        # PV matmul in native orientation against the per-head v_t scratch.
        a_t = lax.dot_general(p, vt_ref[hl], (((1,), (0,)), ((), ())),
                              preferred_element_type=jnp.float32)           # [Tq, C] f32

        out_t = a_t * pl.reciprocal(l, approx=approx)                       # [Tq, C]
        # One small result transpose back to the channels-first output layout.
        o_ref[hl] = jnp.transpose(out_t, (1, 0)).astype(o_ref.dtype)        # [C, Tq]


def _vmem_budget_bytes():
    """~75% of this generation's per-core VMEM (fallback: 48 MiB)."""
    cap = 64 << 20
    try:
        info = pltpu.get_tpu_info()
        cap = int(getattr(info, "vmem_capacity_bytes", cap))
    except Exception:
        pass
    return (3 * cap) // 4


def _plan(T, C, H, itemsize, tile_q=None):
    """Pick (tq, T_pad, Hb, vmem_limit) within the per-generation VMEM budget."""
    budget = _vmem_budget_bytes()
    logits_budget = max(budget // 12, 2 << 20)   # one [tq, T] f32 tile

    if tile_q is not None:
        tq = int(tile_q)
        t_pad = ((T + tq - 1) // tq) * tq
    elif T % 128 == 0:
        tq = 128
        for cand in (1024, 512, 256, 128):
            if T % cand == 0 and cand * T * 4 <= logits_budget:
                tq = cand
                break
        t_pad = T
    elif T < 128 or T * T * 4 <= logits_budget:
        tq, t_pad = T, T
    else:
        # Ragged, large T: pad to a multiple of 128 and mask padded keys.
        t_pad = ((T + 127) // 128) * 128
        tq = 128
        for cand in (1024, 512, 256, 128):
            if t_pad % cand == 0 and cand * t_pad * 4 <= logits_budget:
                tq = cand
                break

    def est(hb):
        blocks = 2 * hb * C * (2 * tq + 2 * t_pad) * itemsize   # dbl-buffered q,o,k,v
        scratch = hb * t_pad * max(C, 128) * itemsize           # v_t (lane-padded)
        temps = hb * 3 * tq * t_pad * 4                         # f32 s/p temporaries
        return blocks + scratch + temps + (2 << 20)

    hb = 1
    for cand in (4, 2):
        if H % cand == 0 and est(cand) <= budget:
            hb = cand
            break

    vmem_limit = int(min(budget, max(16 << 20, est(hb))))
    return tq, t_pad, hb, vmem_limit


def qkv_attention(qkv, n_heads, *, tile_q=None, allow_bf16_matmul=False):
    """Pallas equivalent of QKVAttention.forward.

    :param qkv: [N, 3*H*C, T] array of concatenated Qs, Ks, Vs.
    :return:    [N, H*C, T] array after attention.
    """
    N, width, T = qkv.shape
    assert width % (3 * n_heads) == 0
    H = n_heads
    C = width // (3 * H)
    scale = 1.0 / math.sqrt(math.sqrt(C))
    scale_sq = scale * scale          # q*s . k*s == (q*s^2) . k

    dtype = qkv.dtype
    isz = dtype.itemsize
    tq, t_pad, hb, vmem_limit = _plan(T, C, H, isz, tile_q)
    n_tq = t_pad // tq

    if t_pad != T:
        qkv = jnp.pad(qkv, ((0, 0), (0, 0), (0, t_pad - T)))

    # chunk(3, dim=1) + view(N*H, C, T)  <=>  metadata-only reshape to (N,3,H,C,T).
    qkv_r = qkv.reshape(N, 3, H, C, t_pad)

    is_bf16 = dtype == jnp.bfloat16
    exp_dtype = jnp.bfloat16 if is_bf16 else jnp.float32
    mm_dtype = jnp.bfloat16 if (is_bf16 or allow_bf16_matmul) else dtype
    approx = bool(is_bf16)

    kernel = partial(_qkv_attention_kernel, scale_sq=scale_sq, t_valid=T,
                     mm_dtype=mm_dtype, exp_dtype=exp_dtype, approx=approx)

    cost = pl.CostEstimate(
        flops=int((4 * C + 2) * N * H * t_pad * t_pad),
        transcendentals=int(N * H * t_pad * t_pad),
        bytes_accessed=int(4 * N * H * C * t_pad * isz),
    )

    out = pl.pallas_call(
        kernel,
        out_shape=jax.ShapeDtypeStruct((N, H, C, t_pad), dtype),
        grid=(N, H // hb, n_tq),
        in_specs=[
            # q: chunk 0, per head-block, per query tile.
            pl.BlockSpec((None, None, hb, C, tq), lambda n, h, t: (n, 0, h, 0, t)),
            # k: chunk 1, full T per head-block (block index constant in t -> resident).
            pl.BlockSpec((None, None, hb, C, t_pad), lambda n, h, t: (n, 1, h, 0, 0)),
            # v: chunk 2, full T per head-block.
            pl.BlockSpec((None, None, hb, C, t_pad), lambda n, h, t: (n, 2, h, 0, 0)),
        ],
        out_specs=pl.BlockSpec((None, hb, C, tq), lambda n, h, t: (n, h, 0, t)),
        scratch_shapes=[pltpu.VMEM((hb, t_pad, C), mm_dtype)],
        compiler_params=pltpu.CompilerParams(
            # Query-tile axis "arbitrary": megacore never splits mid-head, so
            # K/V residency (and the per-head v_t transpose) stays valid.
            dimension_semantics=("parallel", "parallel", "arbitrary"),
            vmem_limit_bytes=vmem_limit,
        ),
        cost_estimate=cost,
    )(qkv_r, qkv_r, qkv_r)

    out = out.reshape(N, H * C, t_pad)
    if t_pad != T:
        out = out[:, :, :T]
    return out


def _qkv_attention_ref(qkv, n_heads):
    """Pure-JAX reference mirroring the PyTorch module exactly."""
    N, width, T = qkv.shape
    C = width // (3 * n_heads)
    B = N * n_heads
    scale = 1.0 / math.sqrt(math.sqrt(C))
    q, k, v = jnp.split(qkv, 3, axis=1)
    q = q.reshape(B, C, T)
    k = k.reshape(B, C, T)
    v = v.reshape(B, C, T)
    w = jnp.einsum('bct,bcs->bts', q * scale, k * scale)
    w = jax.nn.softmax(w.astype(jnp.float32), axis=-1).astype(w.dtype)
    a = jnp.einsum('bts,bcs->bct', w, v)
    return a.reshape(N, n_heads * C, T)


if __name__ == "__main__":
    key = jax.random.PRNGKey(0)
    k1, k2, k3 = jax.random.split(key, 3)

    # 1) Small module-consistent shapes (N=2, H=2, C=8, T=16 -> width=48), f32.
    n_heads, N, C, T = 2, 2, 8, 16
    qkv = jax.random.normal(k1, (N, 3 * n_heads * C, T), dtype=jnp.float32)
    out = jax.block_until_ready(qkv_attention(qkv, n_heads))
    ref = _qkv_attention_ref(qkv, n_heads)
    assert out.shape == (N, n_heads * C, T)
    assert jnp.allclose(out, ref, atol=1e-3, rtol=1e-3), \
        float(jnp.max(jnp.abs(out - ref)))

    # 2) Ragged T -> padded sequence + masked keys + multiple query tiles.
    H2, N2, C2, T2 = 2, 1, 16, 160
    qkv2 = jax.random.normal(k2, (N2, 3 * H2 * C2, T2), dtype=jnp.float32)
    out2 = jax.block_until_ready(qkv_attention(qkv2, H2, tile_q=128))
    ref2 = _qkv_attention_ref(qkv2, H2)
    assert out2.shape == (N2, H2 * C2, T2)
    assert jnp.allclose(out2, ref2, atol=1e-3, rtol=1e-3), \
        float(jnp.max(jnp.abs(out2 - ref2)))

    # 3) bf16 input: bf16 exp path, bf16 matmuls, approx reciprocal, head blocking.
    H3, N3, C3, T3 = 4, 1, 16, 256
    qkv3 = jax.random.normal(k3, (N3, 3 * H3 * C3, T3),
                             dtype=jnp.float32).astype(jnp.bfloat16)
    out3 = jax.block_until_ready(qkv_attention(qkv3, H3))
    ref3 = _qkv_attention_ref(qkv3, H3)
    d3 = float(jnp.max(jnp.abs(out3.astype(jnp.float32) - ref3.astype(jnp.float32))))
    assert d3 < 6e-2, d3

    # 4) Gated bf16-MXU path for f32 inputs (small, documented deviation).
    out4 = jax.block_until_ready(qkv_attention(qkv, n_heads, allow_bf16_matmul=True))
    d4 = float(jnp.max(jnp.abs(out4 - ref)))
    assert d4 < 3e-2, d4

    print("KERNEL_OK")
</pallas_src>

<mosaic_0001>
module attributes {stable_mosaic.version = 11 : i64} {
  func.func @_qkv_attention_kernel(%arg0: i32, %arg1: i32, %arg2: i32, %arg3: memref<1x1x2x8x16xf32, #tpu.memory_space<vmem>>, %arg4: memref<1x1x2x8x16xf32, #tpu.memory_space<vmem>>, %arg5: memref<1x1x2x8x16xf32, #tpu.memory_space<vmem>>, %arg6: memref<1x2x8x16xf32, #tpu.memory_space<vmem>>, %arg7: memref<2x16x8xf32, #tpu.memory_space<vmem>>) attributes {dimension_semantics = [#tpu.dimension_semantics<parallel>, #tpu.dimension_semantics<parallel>, #tpu.dimension_semantics<arbitrary>], iteration_bounds = array<i64: 2, 1, 1>, scalar_prefetch = 0 : i64, scratch_operands = 1 : i64, tpu.core_type = #tpu.core_type<tc>, window_params = [{transform_indices = @transform_0, window_bounds = array<i64: 1, 1, 2, 8, 16>}, {transform_indices = @transform_1, window_bounds = array<i64: 1, 1, 2, 8, 16>}, {transform_indices = @transform_2, window_bounds = array<i64: 1, 1, 2, 8, 16>}, {transform_indices = @transform_3, window_bounds = array<i64: 1, 2, 8, 16>}]} {
    %c0_i32 = arith.constant 0 : i32
    %0 = arith.cmpi eq, %arg2, %c0_i32 : i32
    %1 = arith.extui %0 : i1 to i32
    %c0_i32_0 = arith.constant 0 : i32
    %2 = arith.cmpi ne, %1, %c0_i32_0 : i32
    scf.if %2 {
      %c0_43 = arith.constant 0 : index
      %c0_44 = arith.constant 0 : index
      %c0_45 = arith.constant 0 : index
      %c0_46 = arith.constant 0 : index
      %c0_47 = arith.constant 0 : index
      %52 = vector.load %arg5[%c0_43, %c0_44, %c0_45, %c0_46, %c0_47] : memref<1x1x2x8x16xf32, #tpu.memory_space<vmem>>, vector<1x1x1x8x16xf32>
      %53 = vector.shape_cast %52 : vector<1x1x1x8x16xf32> to vector<8x16xf32>
      %54 = tpu.transpose %53, [1, 0] : vector<8x16xf32> -> vector<16x8xf32>
      %c0_48 = arith.constant 0 : index
      %c0_49 = arith.constant 0 : index
      %c0_50 = arith.constant 0 : index
      %55 = vector.load %arg7[%c0_48, %c0_49, %c0_50] : memref<2x16x8xf32, #tpu.memory_space<vmem>>, vector<1x16x8xf32>
      %56 = vector.shape_cast %55 : vector<1x16x8xf32> to vector<16x8xf32>
      %57 = vector.shape_cast %54 : vector<16x8xf32> to vector<1x16x8xf32>
      tpu.vector_store %arg7[%c0_48, %c0_49, %c0_50], %57 {strides = array<i32>} : memref<2x16x8xf32, #tpu.memory_space<vmem>>, vector<1x16x8xf32>,
      %c0_51 = arith.constant 0 : index
      %c0_52 = arith.constant 0 : index
      %c1_53 = arith.constant 1 : index
      %c0_54 = arith.constant 0 : index
      %c0_55 = arith.constant 0 : index
      %58 = vector.load %arg5[%c0_51, %c0_52, %c1_53, %c0_54, %c0_55] : memref<1x1x2x8x16xf32, #tpu.memory_space<vmem>>, vector<1x1x1x8x16xf32>
      %59 = vector.shape_cast %58 : vector<1x1x1x8x16xf32> to vector<8x16xf32>
      %60 = tpu.transpose %59, [1, 0] : vector<8x16xf32> -> vector<16x8xf32>
      %c1_56 = arith.constant 1 : index
      %c0_57 = arith.constant 0 : index
      %c0_58 = arith.constant 0 : index
      %61 = vector.load %arg7[%c1_56, %c0_57, %c0_58] : memref<2x16x8xf32, #tpu.memory_space<vmem>>, vector<1x16x8xf32>
      %62 = vector.shape_cast %61 : vector<1x16x8xf32> to vector<16x8xf32>
      %63 = vector.shape_cast %60 : vector<16x8xf32> to vector<1x16x8xf32>
      tpu.vector_store %arg7[%c1_56, %c0_57, %c0_58], %63 {strides = array<i32>} : memref<2x16x8xf32, #tpu.memory_space<vmem>>, vector<1x16x8xf32>,
    } else {
    }
    %cst = arith.constant 1.000000e+00 : f32
    %3 = vector.broadcast %cst : f32 to vector<16x1xf32>
    %c0 = arith.constant 0 : index
    %c0_1 = arith.constant 0 : index
    %c0_2 = arith.constant 0 : index
    %c0_3 = arith.constant 0 : index
    %c0_4 = arith.constant 0 : index
    %4 = vector.load %arg3[%c0, %c0_1, %c0_2, %c0_3, %c0_4] : memref<1x1x2x8x16xf32, #tpu.memory_space<vmem>>, vector<1x1x1x8x16xf32>
    %5 = vector.shape_cast %4 : vector<1x1x1x8x16xf32> to vector<8x16xf32>
    %6 = tpu.transpose %5, [1, 0] : vector<8x16xf32> -> vector<16x8xf32>
    %cst_5 = arith.constant 0.353553385 : f32
    %7 = vector.broadcast %cst_5 : f32 to vector<16x8xf32>
    %8 = arith.mulf %6, %7 : vector<16x8xf32>
    %c0_6 = arith.constant 0 : index
    %c0_7 = arith.constant 0 : index
    %c0_8 = arith.constant 0 : index
    %c0_9 = arith.constant 0 : index
    %c0_10 = arith.constant 0 : index
    %9 = vector.load %arg4[%c0_6, %c0_7, %c0_8, %c0_9, %c0_10] : memref<1x1x2x8x16xf32, #tpu.memory_space<vmem>>, vector<1x1x1x8x16xf32>
    %10 = vector.shape_cast %9 : vector<1x1x1x8x16xf32> to vector<8x16xf32>
    %cst_11 = arith.constant dense<0.000000e+00> : vector<16x16xf32>
    %11 = tpu.matmul %8, %10, %cst_11 {dimension_numbers = #tpu.dot_dimension_numbers<[1], [0], [0], [1], [0, 0, 1, 1], [], []>} : vector<16x8xf32>, vector<8x16xf32>, vector<16x16xf32> -> vector<16x16xf32>
    %cst_12 = arith.constant dense<0xFF800000> : vector<16xf32>
    %12 = vector.multi_reduction <maximumf>, %11, %cst_12 [1] : vector<16x16xf32> to vector<16xf32>
    %13 = vector.shape_cast %12 : vector<16xf32> to vector<16x1xf32>
    %14 = vector.broadcast %13 : vector<16x1xf32> to vector<16x16xf32>
    %15 = arith.subf %11, %14 : vector<16x16xf32>
    %16 = math.exp %15 : vector<16x16xf32>
    %cst_13 = arith.constant dense<0.000000e+00> : vector<16x1xf32>
    %17 = tpu.matmul %16, %3, %cst_13 {dimension_numbers = #tpu.dot_dimension_numbers<[1], [0], [0], [1], [0, 0, 1, 1], [], []>} : vector<16x16xf32>, vector<16x1xf32>, vector<16x1xf32> -> vector<16x1xf32>
    %c0_14 = arith.constant 0 : index
    %c0_15 = arith.constant 0 : index
    %c0_16 = arith.constant 0 : index
    %18 = vector.load %arg7[%c0_14, %c0_15, %c0_16] : memref<2x16x8xf32, #tpu.memory_space<vmem>>, vector<1x16x8xf32>
    %19 = vector.shape_cast %18 : vector<1x16x8xf32> to vector<16x8xf32>
    %cst_17 = arith.constant dense<0.000000e+00> : vector<16x8xf32>
    %20 = tpu.matmul %16, %19, %cst_17 {dimension_numbers = #tpu.dot_dimension_numbers<[1], [0], [0], [1], [0, 0, 1, 1], [], []>} : vector<16x16xf32>, vector<16x8xf32>, vector<16x8xf32> -> vector<16x8xf32>
    %21 = tpu.reciprocal %17 : vector<16x1xf32> -> vector<16x1xf32>
    %22 = vector.broadcast %21 : vector<16x1xf32> to vector<16x8xf32>
    %23 = arith.mulf %20, %22 : vector<16x8xf32>
    %24 = tpu.transpose %23, [1, 0] : vector<16x8xf32> -> vector<8x16xf32>
    %c0_18 = arith.constant 0 : index
    %c0_19 = arith.constant 0 : index
    %c0_20 = arith.constant 0 : index
    %c0_21 = arith.constant 0 : index
    %25 = vector.load %arg6[%c0_18, %c0_19, %c0_20, %c0_21] : memref<1x2x8x16xf32, #tpu.memory_space<vmem>>, vector<1x1x8x16xf32>
    %26 = vector.shape_cast %25 : vector<1x1x8x16xf32> to vector<8x16xf32>
    %27 = vector.shape_cast %24 : vector<8x16xf32> to vector<1x1x8x16xf32>
    tpu.vector_store %arg6[%c0_18, %c0_19, %c0_20, %c0_21], %27 {strides = array<i32>} : memref<1x2x8x16xf32, #tpu.memory_space<vmem>>, vector<1x1x8x16xf32>,
    %c0_22 = arith.constant 0 : index
    %c0_23 = arith.constant 0 : index
    %c1 = arith.constant 1 : index
    %c0_24 = arith.constant 0 : index
    %c0_25 = arith.constant 0 : index
    %28 = vector.load %arg3[%c0_22, %c0_23, %c1, %c0_24, %c0_25] : memref<1x1x2x8x16xf32, #tpu.memory_space<vmem>>, vector<1x1x1x8x16xf32>
    %29 = vector.shape_cast %28 : vector<1x1x1x8x16xf32> to vector<8x16xf32>
    %30 = tpu.transpose %29, [1, 0] : vector<8x16xf32> -> vector<16x8xf32>
    %cst_26 = arith.constant 0.353553385 : f32
    %31 = vector.broadcast %cst_26 : f32 to vector<16x8xf32>
    %32 = arith.mulf %30, %31 : vector<16x8xf32>
    %c0_27 = arith.constant 0 : index
    %c0_28 = arith.constant 0 : index
    %c1_29 = arith.constant 1 : index
    %c0_30 = arith.constant 0 : index
    %c0_31 = arith.constant 0 : index
    %33 = vector.load %arg4[%c0_27, %c0_28, %c1_29, %c0_30, %c0_31] : memref<1x1x2x8x16xf32, #tpu.memory_space<vmem>>, vector<1x1x1x8x16xf32>
    %34 = vector.shape_cast %33 : vector<1x1x1x8x16xf32> to vector<8x16xf32>
    %cst_32 = arith.constant dense<0.000000e+00> : vector<16x16xf32>
    %35 = tpu.matmul %32, %34, %cst_32 {dimension_numbers = #tpu.dot_dimension_numbers<[1], [0], [0], [1], [0, 0, 1, 1], [], []>} : vector<16x8xf32>, vector<8x16xf32>, vector<16x16xf32> -> vector<16x16xf32>
    %cst_33 = arith.constant dense<0xFF800000> : vector<16xf32>
    %36 = vector.multi_reduction <maximumf>, %35, %cst_33 [1] : vector<16x16xf32> to vector<16xf32>
    %37 = vector.shape_cast %36 : vector<16xf32> to vector<16x1xf32>
    %38 = vector.broadcast %37 : vector<16x1xf32> to vector<16x16xf32>
    %39 = arith.subf %35, %38 : vector<16x16xf32>
    %40 = math.exp %39 : vector<16x16xf32>
    %cst_34 = arith.constant dense<0.000000e+00> : vector<16x1xf32>
    %41 = tpu.matmul %40, %3, %cst_34 {dimension_numbers = #tpu.dot_dimension_numbers<[1], [0], [0], [1], [0, 0, 1, 1], [], []>} : vector<16x16xf32>, vector<16x1xf32>, vector<16x1xf32> -> vector<16x1xf32>
    %c1_35 = arith.constant 1 : index
    %c0_36 = arith.constant 0 : index
    %c0_37 = arith.constant 0 : index
    %42 = vector.load %arg7[%c1_35, %c0_36, %c0_37] : memref<2x16x8xf32, #tpu.memory_space<vmem>>, vector<1x16x8xf32>
    %43 = vector.shape_cast %42 : vector<1x16x8xf32> to vector<16x8xf32>
    %cst_38 = arith.constant dense<0.000000e+00> : vector<16x8xf32>
    %44 = tpu.matmul %40, %43, %cst_38 {dimension_numbers = #tpu.dot_dimension_numbers<[1], [0], [0], [1], [0, 0, 1, 1], [], []>} : vector<16x16xf32>, vector<16x8xf32>, vector<16x8xf32> -> vector<16x8xf32>
    %45 = tpu.reciprocal %41 : vector<16x1xf32> -> vector<16x1xf32>
    %46 = vector.broadcast %45 : vector<16x1xf32> to vector<16x8xf32>
    %47 = arith.mulf %44, %46 : vector<16x8xf32>
    %48 = tpu.transpose %47, [1, 0] : vector<16x8xf32> -> vector<8x16xf32>
    %c0_39 = arith.constant 0 : index
    %c1_40 = arith.constant 1 : index
    %c0_41 = arith.constant 0 : index
    %c0_42 = arith.constant 0 : index
    %49 = vector.load %arg6[%c0_39, %c1_40, %c0_41, %c0_42] : memref<1x2x8x16xf32, #tpu.memory_space<vmem>>, vector<1x1x8x16xf32>
    %50 = vector.shape_cast %49 : vector<1x1x8x16xf32> to vector<8x16xf32>
    %51 = vector.shape_cast %48 : vector<8x16xf32> to vector<1x1x8x16xf32>
    tpu.vector_store %arg6[%c0_39, %c1_40, %c0_41, %c0_42], %51 {strides = array<i32>} : memref<1x2x8x16xf32, #tpu.memory_space<vmem>>, vector<1x1x8x16xf32>,
    return
  }
  func.func @transform_0(%arg0: i32, %arg1: i32, %arg2: i32) -> (i32, i32, i32, i32, i32) {
    %c0_i32 = arith.constant 0 : i32
    %c0_i32_0 = arith.constant 0 : i32
    %c0_i32_1 = arith.constant 0 : i32
    return %arg0, %c0_i32, %arg1, %c0_i32_0, %arg2 : i32, i32, i32, i32, i32
  }
  func.func @transform_1(%arg0: i32, %arg1: i32, %arg2: i32) -> (i32, i32, i32, i32, i32) {
    %c1_i32 = arith.constant 1 : i32
    %c0_i32 = arith.constant 0 : i32
    %c0_i32_0 = arith.constant 0 : i32
    %c0_i32_1 = arith.constant 0 : i32
    return %arg0, %c1_i32, %arg1, %c0_i32, %c0_i32_0 : i32, i32, i32, i32, i32
  }
  func.func @transform_2(%arg0: i32, %arg1: i32, %arg2: i32) -> (i32, i32, i32, i32, i32) {
    %c2_i32 = arith.constant 2 : i32
    %c0_i32 = arith.constant 0 : i32
    %c0_i32_0 = arith.constant 0 : i32
    %c0_i32_1 = arith.constant 0 : i32
    return %arg0, %c2_i32, %arg1, %c0_i32, %c0_i32_0 : i32, i32, i32, i32, i32
  }
  func.func @transform_3(%arg0: i32, %arg1: i32, %arg2: i32) -> (i32, i32, i32, i32) {
    %c0_i32 = arith.constant 0 : i32
    %c0_i32_0 = arith.constant 0 : i32
    return %arg0, %arg1, %c0_i32, %arg2 : i32, i32, i32, i32
  }
}

</mosaic_0001>

<llo_original>
// kernel: tpu_custom_call.1
$region0: #{tpu_custom_call.1}
  #allocation0 [shape = 'u32[]', space=smem, size = 0x4, offset = 0x4, fixed_abs, tag = 'smem constant byte address 0x4 - core index']
  #allocation1 [shape = 'u32[72,128]{1,0:T(1,128)}', space=vmem, size = 0x9000, scoped, tag = 'internal scratch']
  #allocation2 [shape = 'f32[2,16,8]{2,1,0:T(8,128)}', space=vmem, size = 0x4000, scoped, tag = 'scratch operand']
  %s0 = inlined_call_operand.hbm [shape: f32[2,3,2,8,16], index: 0, kind: input, shape index: {}]
  %s1 = inlined_call_operand.hbm [shape: f32[2,3,2,8,16], index: 1, kind: input, shape index: {}]
  %s2 = inlined_call_operand.hbm [shape: f32[2,3,2,8,16], index: 2, kind: input, shape index: {}]
  %s3 = inlined_call_operand.hbm [shape: f32[2,2,8,16], index: 3, kind: output, shape index: {}]
  %s4 = sld [smem:[#allocation0]]
  $region61: #{tpu_custom_call.1} parent=0
    _
  %s6 = ssub.s32 1, %s4
  %s7 = scalar_select 0, %s6, %s4
  $region1: #{tpu_custom_call.1} parent=0
    #allocation3 [shape = 'u8[16384]{0}', space=vmem, size = 0x4000, scoped, tag = 'input window, operand 0']
    #allocation4 [shape = 's32[2]{0}', space=sflag, size = 0x8, scoped, tag = 'scoped memory for tpu_custom_call.1']
    #allocation5 [shape = 's32[2]{0}', space=sflag, size = 0x8, scoped, tag = 'scoped memory for tpu_custom_call.1']
    #allocation6 [shape = 'u8[16384]{0}', space=vmem, size = 0x4000, scoped, tag = 'input window, operand 1']
    #allocation7 [shape = 's32[2]{0}', space=sflag, size = 0x8, scoped, tag = 'scoped memory for tpu_custom_call.1']
    #allocation8 [shape = 'u8[16384]{0}', space=vmem, size = 0x4000, scoped, tag = 'input window, operand 2']
    #allocation9 [shape = 'u8[16384]{0}', space=vmem, size = 0x4000, scoped, tag = 'output window, operand 0']
    %8 = vsyncpa [#allocation4], 0
    %s9 = scalar_lea.sflag [#allocation4], 1
    %10 = vsyncpa %s9, 0
    %11 = vsyncpa [#allocation7], 0
    %s12 = scalar_lea.sflag [#allocation7], 1
    %13 = vsyncpa %s12, 0
    %14 = vsyncpa [#allocation5], 0
    %s15 = scalar_lea.sflag [#allocation5], 1
    %16 = vsyncpa %s15, 0
    loop: start=0, step=1, limit=4
    $region2: #{tpu_custom_call.1} parent=1 // loop_pre_header
      _
    $region3: #{tpu_custom_call.1} parent=1 // loop_header
      %s18 = sphi 0, %s22
      %p19 = scmp.ge.s32.totalorder %s18, 4
      %s25 = sphi 0, %s44
      %s26 = sphi 0, %s40
      %s27 = sphi 0, %s36
      %s28 = sphi 0, %s25
      %s29 = sphi 0, %s26
      %s30 = sphi 0, %s27
      %s31 = sphi 0, %s28
      %s32 = sphi 0, %s29
      %s33 = sphi 0, %s30
      %s51 = sphi 0, %s53
      %s54 = sphi 0, %s51
      %s55 = sphi 0, %s54
      %s71 = sphi 0, %s55
      %s79 = sphi 0, %s81
      %s82 = sphi 0, %s79
      %s83 = sphi 0, %s82
      %s99 = sphi 0, %s83
      %s107 = sphi 0, %s109
      %s110 = sphi 0, %s107
      %s111 = sphi 0, %s110
      %s127 = sphi 0, %s111
      %s137 = sphi 0, %s139
      %s140 = sphi 0, %s137
      %s141 = sphi 0, %s140
      %s157 = sphi 0, %s141
    $region4: #{tpu_custom_call.1} parent=1 // loop_header_branch
      %21 = sbr.rel (%p19) target = $region8
    $region5: #{tpu_custom_call.1} parent=1 // loop_body
      %s23 = ssub.s32 %s18, 1
      %s24 = ssub.s32 %s18, 2
      %s34 = sadd.s32 1, %s27
      %p35 = scmp.ge.s32.totalorder %s34, 1
      %s36 = scalar_select %p35, 0, %s34
      %s37 = sadd.s32 1, %s26
      %s38 = scalar_select %p35, %s37, %s26
      %p39 = scmp.ge.s32.totalorder %s38, 1
      %s40 = scalar_select %p39, 0, %s38
      %s41 = sadd.s32 1, %s25
      %s42 = scalar_select %p39, %s41, %s25
      %p43 = scmp.ge.s32.totalorder %s42, 2
      %s44 = scalar_select %p43, 0, %s42
      %s45 = ssub.s32 %s25, %s44
      %s46 = ssub.s32 %s26, %s40
      %s47 = sor.u32 %s45, %s46
      %s48 = ssub.s32 %s27, %s36
      %s49 = sor.u32 %s47, %s48
      %p50 = scmp.eq.s32.totalorder %s49, 0
      %s52 = sadd.s32 %s51, 1
      %s53 = scalar_select %p50, %s51, %s52
      %p56 = pneg %p50
      %p57 = scmp.eq.s32.totalorder %s18, 1
      %p58 = por %p56, %p57
      %p59 = scmp.ne.s32.totalorder %s51, %s54
      %p60 = scmp.eq.s32.totalorder %s18, 0
      %p61 = por %p59, %p60
      %p62 = scmp.ne.s32.totalorder %s51, %s54
      %p63 = scmp.eq.s32.totalorder %s23, 1
      %p64 = por %p62, %p63
      %p65 = scmp.ne.s32.totalorder %s54, %s55
      %p66 = scmp.eq.s32.totalorder %s23, 0
      %p67 = por %p65, %p66
      %p68 = scmp.ne.s32.totalorder %s54, %s55
      %p69 = scmp.eq.s32.totalorder %s24, 1
      %p70 = por %p68, %p69
      %p72 = scmp.ne.s32.totalorder %s55, %s71
      %p73 = scmp.eq.s32.totalorder %s24, 0
      %p74 = por %p72, %p73
      %s75 = ssub.s32 %s25, %s44
      %s76 = ssub.s32 %s26, %s40
      %s77 = sor.u32 %s75, %s76
      %p78 = scmp.eq.s32.totalorder %s77, 0
      %s80 = sadd.s32 %s79, 1
      %s81 = scalar_select %p78, %s79, %s80
      %p84 = pneg %p78
      %p85 = scmp.eq.s32.totalorder %s18, 1
      %p86 = por %p84, %p85
      %p87 = scmp.ne.s32.totalorder %s79, %s82
      %p88 = scmp.eq.s32.totalorder %s18, 0
      %p89 = por %p87, %p88
      %p90 = scmp.ne.s32.totalorder %s79, %s82
      %p91 = scmp.eq.s32.totalorder %s23, 1
      %p92 = por %p90, %p91
      %p93 = scmp.ne.s32.totalorder %s82, %s83
      %p94 = scmp.eq.s32.totalorder %s23, 0
      %p95 = por %p93, %p94
      %p96 = scmp.ne.s32.totalorder %s82, %s83
      %p97 = scmp.eq.s32.totalorder %s24, 1
      %p98 = por %p96, %p97
      %p100 = scmp.ne.s32.totalorder %s83, %s99
      %p101 = scmp.eq.s32.totalorder %s24, 0
      %p102 = por %p100, %p101
      %s103 = ssub.s32 %s25, %s44
      %s104 = ssub.s32 %s26, %s40
      %s105 = sor.u32 %s103, %s104
      %p106 = scmp.eq.s32.totalorder %s105, 0
      %s108 = sadd.s32 %s107, 1
      %s109 = scalar_select %p106, %s107, %s108
      %p112 = pneg %p106
      %p113 = scmp.eq.s32.totalorder %s18, 1
      %p114 = por %p112, %p113
      %p115 = scmp.ne.s32.totalorder %s107, %s110
      %p116 = scmp.eq.s32.totalorder %s18, 0
      %p117 = por %p115, %p116
      %p118 = scmp.ne.s32.totalorder %s107, %s110
      %p119 = scmp.eq.s32.totalorder %s23, 1
      %p120 = por %p118, %p119
      %p121 = scmp.ne.s32.totalorder %s110, %s111
      %p122 = scmp.eq.s32.totalorder %s23, 0
      %p123 = por %p121, %p122
      %p124 = scmp.ne.s32.totalorder %s110, %s111
      %p125 = scmp.eq.s32.totalorder %s24, 1
      %p126 = por %p124, %p125
      %p128 = scmp.ne.s32.totalorder %s111, %s127
      %p129 = scmp.eq.s32.totalorder %s24, 0
      %p130 = por %p128, %p129
      %s131 = ssub.s32 %s25, %s44
      %s132 = ssub.s32 %s26, %s40
      %s133 = sor.u32 %s131, %s132
      %s134 = ssub.s32 %s27, %s36
      %s135 = sor.u32 %s133, %s134
      %p136 = scmp.eq.s32.totalorder %s135, 0
      %s138 = sadd.s32 %s137, 1
      %s139 = scalar_select %p136, %s137, %s138
      %p142 = pneg %p136
      %p143 = scmp.eq.s32.totalorder %s18, 1
      %p144 = por %p142, %p143
      %p145 = scmp.ne.s32.totalorder %s137, %s140
      %p146 = scmp.eq.s32.totalorder %s18, 0
      %p147 = por %p145, %p146
      %p148 = scmp.ne.s32.totalorder %s137, %s140
      %p149 = scmp.eq.s32.totalorder %s23, 1
      %p150 = por %p148, %p149
      %p151 = scmp.ne.s32.totalorder %s140, %s141
      %p152 = scmp.eq.s32.totalorder %s23, 0
      %p153 = por %p151, %p152
      %p154 = scmp.ne.s32.totalorder %s140, %s141
      %p155 = scmp.eq.s32.totalorder %s24, 1
      %p156 = por %p154, %p155
      %p158 = scmp.ne.s32.totalorder %s141, %s157
      %p159 = scmp.eq.s32.totalorder %s24, 0
      %p160 = por %p158, %p159
      %p161 = scmp.le.s32.totalorder 1, %s18
      %p162 = scmp.lt.s32.totalorder %s18, 3
      %p163 = pnand %p161, %p162
      %p164 = pneg %p163
      // Predicated region
      $region9: #{tpu_custom_call.1} parent=5 // pred_check
        _
      $region10: #{tpu_custom_call.1} parent=5 // pred_check_branch
        %166 = sbr.rel (%p163) target = $region12
      $region11: #{tpu_custom_call.1} parent=5 // pred_region
        %s167 = ssub.s32 %s18, 1
      $region12: #{tpu_custom_call.1} parent=5 // pred_fallthru
        _
      %p168 = scmp.lt.s32.totalorder %s18, 2
      // Predicated region
      $region13: #{tpu_custom_call.1} parent=5 // pred_check
        %p169 = pneg %p168
      $region14: #{tpu_custom_call.1} parent=5 // pred_check_branch
        %171 = sbr.rel (%p169) target = $region16
      $region15: #{tpu_custom_call.1} parent=5 // pred_region
        // Predicated region
        $region17: #{tpu_custom_call.1} parent=15 // pred_check
          %p172 = pneg %p61
        $region18: #{tpu_custom_call.1} parent=15 // pred_check_branch
          %174 = sbr.rel (%p172) target = $region20
        $region19: #{tpu_custom_call.1} parent=15 // pred_region
          %s175 = sand.u32 %s51, 1
          %s176 = scalar_lea.sflag [#allocation4], %s175
          %s177 = sand.u32 %s51, 1
          %s178 = smul.addr %s177, 16
          %s179 = scalar_lea.vmem [#allocation3], %s178
          %s180 = smul.u32 2, %s26
          %182 = vsyncadd %s176, 0
          %s183 = sadd.s32 %s27, %s180
          %s184 = smul.addr %s25, 6
          %s185 = sadd.s32 %s183, %s184
          %s186 = smul.addr %s185, 8
          %s187 = scalar_lea.hbm %s0, %s186
          %s188 = sshll.u32 %s187, 4
          %s189 = int_to_ptr.hbm [resolvable:$true] %s188
          %s190 = sshll.u32 %s179, 4
          %s191 = int_to_ptr.vmem [resolvable:$true] %s190
          %196 = dma.hbm_to_vmem [thread:$0]  %s189, 256, %s191, %s176, 128, 128, 8
        $region20: #{tpu_custom_call.1} parent=15 // pred_fallthru
          _
        // Predicated region
        $region21: #{tpu_custom_call.1} parent=15 // pred_check
          %p197 = pneg %p89
        $region22: #{tpu_custom_call.1} parent=15 // pred_check_branch
          %199 = sbr.rel (%p197) target = $region24
        $region23: #{tpu_custom_call.1} parent=15 // pred_region
          %s200 = sand.u32 %s18, 1
          %s201 = scalar_lea.sflag [#allocation7], %s200
          %s202 = sand.u32 %s79, 1
          %s203 = smul.addr %s202, 16
          %s204 = scalar_lea.vmem [#allocation6], %s203
          %s205 = smul.u32 2, %s26
          %207 = vsyncadd %s201, 0
          %s208 = sadd.s32 %s205, 2
          %s209 = smul.addr %s25, 6
          %s210 = sadd.s32 %s208, %s209
          %s211 = smul.addr %s210, 8
          %s212 = scalar_lea.hbm %s1, %s211
          %s213 = sshll.u32 %s212, 4
          %s214 = int_to_ptr.hbm [resolvable:$true] %s213
          %s215 = sshll.u32 %s204, 4
          %s216 = int_to_ptr.vmem [resolvable:$true] %s215
          %221 = dma.hbm_to_vmem [thread:$0]  %s214, 256, %s216, %s201, 128, 128, 8
        $region24: #{tpu_custom_call.1} parent=15 // pred_fallthru
          _
        // Predicated region
        $region25: #{tpu_custom_call.1} parent=15 // pred_check
          %p222 = pneg %p117
        $region26: #{tpu_custom_call.1} parent=15 // pred_check_branch
          %224 = sbr.rel (%p222) target = $region28
        $region27: #{tpu_custom_call.1} parent=15 // pred_region
          %s225 = sand.u32 %s18, 1
          %s226 = scalar_lea.sflag [#allocation7], %s225
          %s227 = sand.u32 %s107, 1
          %s228 = smul.addr %s227, 16
          %s229 = scalar_lea.vmem [#allocation8], %s228
          %s230 = smul.u32 2, %s26
          %232 = vsyncadd %s226, 0
          %s233 = sadd.s32 %s230, 4
          %s234 = smul.addr %s25, 6
          %s235 = sadd.s32 %s233, %s234
          %s236 = smul.addr %s235, 8
          %s237 = scalar_lea.hbm %s2, %s236
          %s238 = sshll.u32 %s237, 4
          %s239 = int_to_ptr.hbm [resolvable:$true] %s238
          %s240 = sshll.u32 %s229, 4
          %s241 = int_to_ptr.vmem [resolvable:$true] %s240
          %246 = dma.hbm_to_vmem [thread:$0]  %s239, 256, %s241, %s226, 128, 128, 8
        $region28: #{tpu_custom_call.1} parent=15 // pred_fallthru
          _
      $region16: #{tpu_custom_call.1} parent=5 // pred_fallthru
        _
      %p247 = scmp.le.s32.totalorder 1, %s18
      %p248 = scmp.lt.s32.totalorder %s18, 3
      %p249 = pnand %p247, %p248
      %p250 = pneg %p249
      // Predicated region
      $region29: #{tpu_custom_call.1} parent=5 // pred_check
        _
      $region30: #{tpu_custom_call.1} parent=5 // pred_check_branch
        %252 = sbr.rel (%p249) target = $region32
      $region31: #{tpu_custom_call.1} parent=5 // pred_region
        %s253 = ssub.s32 %s18, 1
        %s254 = sand.u32 %s54, 1
        %s255 = scalar_lea.sflag [#allocation4], %s254
        %s256 = sand.u32 %s54, 1
        %s257 = smul.addr %s256, 16
        %s258 = scalar_lea.vmem [#allocation3], %s257
        // Predicated region
        $region33: #{tpu_custom_call.1} parent=31 // pred_check
          %p259 = pneg %p67
        $region34: #{tpu_custom_call.1} parent=31 // pred_check_branch
          %261 = sbr.rel (%p259) target = $region36
        $region35: #{tpu_custom_call.1} parent=31 // pred_region
          %263 = dma.done %s255, 256
        $region36: #{tpu_custom_call.1} parent=31 // pred_fallthru
          _
        %s264 = sand.u32 %s23, 1
        %s265 = scalar_lea.sflag [#allocation7], %s264
        %s266 = sand.u32 %s82, 1
        %s267 = smul.addr %s266, 16
        %s268 = scalar_lea.vmem [#allocation6], %s267
        // Predicated region
        $region37: #{tpu_custom_call.1} parent=31 // pred_check
          %p269 = pneg %p95
        $region38: #{tpu_custom_call.1} parent=31 // pred_check_branch
          %271 = sbr.rel (%p269) target = $region40
        $region39: #{tpu_custom_call.1} parent=31 // pred_region
          %273 = dma.done %s265, 256
        $region40: #{tpu_custom_call.1} parent=31 // pred_fallthru
          _
        %s274 = sand.u32 %s23, 1
        %s275 = scalar_lea.sflag [#allocation7], %s274
        %s276 = sand.u32 %s110, 1
        %s277 = smul.addr %s276, 16
        %s278 = scalar_lea.vmem [#allocation8], %s277
        // Predicated region
        $region41: #{tpu_custom_call.1} parent=31 // pred_check
          %p279 = pneg %p123
        $region42: #{tpu_custom_call.1} parent=31 // pred_check_branch
          %281 = sbr.rel (%p279) target = $region44
        $region43: #{tpu_custom_call.1} parent=31 // pred_region
          %283 = dma.done %s275, 256
        $region44: #{tpu_custom_call.1} parent=31 // pred_fallthru
          _
        %s284 = sand.u32 %s54, 1
        %s285 = scalar_lea.sflag [#allocation4], %s284
        %s286 = sand.u32 %s54, 1
        %s287 = smul.addr %s286, 16
        %s288 = scalar_lea.vmem [#allocation3], %s287
        %p289 = pneg %p67
        %p290 = pneg %p64
        %s291 = sand.u32 %s23, 1
        %s292 = scalar_lea.sflag [#allocation7], %s291
        %s293 = sand.u32 %s82, 1
        %s294 = smul.addr %s293, 16
        %s295 = scalar_lea.vmem [#allocation6], %s294
        %p296 = pneg %p95
        %p297 = pneg %p92
        %s298 = sand.u32 %s23, 1
        %s299 = scalar_lea.sflag [#allocation7], %s298
        %s300 = sand.u32 %s110, 1
        %s301 = smul.addr %s300, 16
        %s302 = scalar_lea.vmem [#allocation8], %s301
        %p303 = pneg %p123
        %p304 = pneg %p120
        %p305 = pneg %p153
        %p306 = pneg %p150
        %s307 = sand.u32 %s140, 1
        %s308 = scalar_lea.sflag [#allocation5], %s307
        %s309 = sand.u32 %s140, 1
        %s310 = smul.addr %s309, 16
        %s311 = scalar_lea.vmem [#allocation9], %s310
        %s312 = smul.u32 2, %s29
        %s313 = smul.u32 2, %s29
        %s314 = smul.u32 2, %s29
        %s315 = smul.u32 2, %s29
        %p316 = scmp.eq.s32.totalorder %s30, 0
        // Predicated region
        $region45: #{tpu_custom_call.1} parent=31 // pred_check
          %p317 = pneg %p316
        $region46: #{tpu_custom_call.1} parent=31 // pred_check_branch
          %319 = sbr.rel (%p317) target = $region48
        $region47: #{tpu_custom_call.1} parent=31 // pred_region
          %v320 = vld [vmem:[%s278] sm:$0xff]
          %321 = vxpose.xlu0.b32.start [1/16] %v320, 128
          %322 = vxpose.xlu0.b32.cont [2/16] 0.0, 128
          %323 = vxpose.xlu0.b32.cont [3/16] 0.0, 128
          %324 = vxpose.xlu0.b32.cont [4/16] 0.0, 128
          %325 = vxpose.xlu0.b32.cont [5/16] 0.0, 128
          %326 = vxpose.xlu0.b32.cont [6/16] 0.0, 128
          %327 = vxpose.xlu0.b32.cont [7/16] 0.0, 128
          %328 = vxpose.xlu0.b32.cont [8/16] 0.0, 128
          %329 = vxpose.xlu0.b32.cont [9/16] 0.0, 128
          %330 = vxpose.xlu0.b32.cont [10/16] 0.0, 128
          %331 = vxpose.xlu0.b32.cont [11/16] 0.0, 128
          %332 = vxpose.xlu0.b32.cont [12/16] 0.0, 128
          %333 = vxpose.xlu0.b32.cont [13/16] 0.0, 128
          %334 = vxpose.xlu0.b32.cont [14/16] 0.0, 128
          %335 = vxpose.xlu0.b32.cont [15/16] 0.0, 128
          %336 = vxpose.xlu0.b32.end [16/16] 0.0, 128
          %v337 = vpop.trf.xlu0
          %v338 = vpop.trf.xlu0
          %v339 = vpop.trf.xlu0
          %v340 = vpop.trf.xlu0
          %v341 = vpop.trf.xlu0
          %v342 = vpop.trf.xlu0
          %v343 = vpop.trf.xlu0
          %v344 = vpop.trf.xlu0
          %v345 = vpop.trf.xlu0
          %v346 = vpop.trf.xlu0
          %v347 = vpop.trf.xlu0
          %v348 = vpop.trf.xlu0
          %v349 = vpop.trf.xlu0
          %v350 = vpop.trf.xlu0
          %v351 = vpop.trf.xlu0
          %v352 = vpop.trf.xlu0
          %vm353 = vcmask 64512
          %354 = vst.msk [vmem:[#allocation2] sm:$0xff] %vm353, %v337
          %355 = vst.msk [vmem:[#allocation2 + $0x8] sm:$0xff] %vm353, %v338
          %s356 = scalar_lea.vmem %s278, 8 [#allocation8]
          %v357 = vld [vmem:[%s356] sm:$0xff]
          %358 = vxpose.xlu0.b32.start [1/16] %v357, 128
          %359 = vxpose.xlu0.b32.cont [2/16] 0.0, 128
          %360 = vxpose.xlu0.b32.cont [3/16] 0.0, 128
          %361 = vxpose.xlu0.b32.cont [4/16] 0.0, 128
          %362 = vxpose.xlu0.b32.cont [5/16] 0.0, 128
          %363 = vxpose.xlu0.b32.cont [6/16] 0.0, 128
          %364 = vxpose.xlu0.b32.cont [7/16] 0.0, 128
          %365 = vxpose.xlu0.b32.cont [8/16] 0.0, 128
          %366 = vxpose.xlu0.b32.cont [9/16] 0.0, 128
          %367 = vxpose.xlu0.b32.cont [10/16] 0.0, 128
          %368 = vxpose.xlu0.b32.cont [11/16] 0.0, 128
          %369 = vxpose.xlu0.b32.cont [12/16] 0.0, 128
          %370 = vxpose.xlu0.b32.cont [13/16] 0.0, 128
          %371 = vxpose.xlu0.b32.cont [14/16] 0.0, 128
          %372 = vxpose.xlu0.b32.cont [15/16] 0.0, 128
          %373 = vxpose.xlu0.b32.end [16/16] 0.0, 128
          %v374 = vpop.trf.xlu0
          %v375 = vpop.trf.xlu0
          %v376 = vpop.trf.xlu0
          %v377 = vpop.trf.xlu0
          %v378 = vpop.trf.xlu0
          %v379 = vpop.trf.xlu0
          %v380 = vpop.trf.xlu0
          %v381 = vpop.trf.xlu0
          %v382 = vpop.trf.xlu0
          %v383 = vpop.trf.xlu0
          %v384 = vpop.trf.xlu0
          %v385 = vpop.trf.xlu0
          %v386 = vpop.trf.xlu0
          %v387 = vpop.trf.xlu0
          %v388 = vpop.trf.xlu0
          %v389 = vpop.trf.xlu0
          %s390 = scalar_lea.vmem [#allocation2], 16
          %391 = vst.msk [vmem:[%s390] sm:$0xff] %vm353, %v374
          %392 = vst.msk [vmem:[%s390 + $0x8] sm:$0xff] %vm353, %v375
        $region48: #{tpu_custom_call.1} parent=31 // pred_fallthru
          _
        %v393 = vld [vmem:[%s258] sm:$0xff]
        %394 = vxpose.xlu0.b32.start [1/16] %v393, 128
        %395 = vxpose.xlu0.b32.cont [2/16] 0.0, 128
        %396 = vxpose.xlu0.b32.cont [3/16] 0.0, 128
        %397 = vxpose.xlu0.b32.cont [4/16] 0.0, 128
        %398 = vxpose.xlu0.b32.cont [5/16] 0.0, 128
        %399 = vxpose.xlu0.b32.cont [6/16] 0.0, 128
        %400 = vxpose.xlu0.b32.cont [7/16] 0.0, 128
        %401 = vxpose.xlu0.b32.cont [8/16] 0.0, 128
        %402 = vxpose.xlu0.b32.cont [9/16] 0.0, 128
        %403 = vxpose.xlu0.b32.cont [10/16] 0.0, 128
        %404 = vxpose.xlu0.b32.cont [11/16] 0.0, 128
        %405 = vxpose.xlu0.b32.cont [12/16] 0.0, 128
        %406 = vxpose.xlu0.b32.cont [13/16] 0.0, 128
        %407 = vxpose.xlu0.b32.cont [14/16] 0.0, 128
        %408 = vxpose.xlu0.b32.cont [15/16] 0.0, 128
        %409 = vxpose.xlu0.b32.end [16/16] 0.0, 128
        %v410 = vpop.trf.xlu0
        %v411 = vpop.trf.xlu0
        %v412 = vpop.trf.xlu0
        %v413 = vpop.trf.xlu0
        %v414 = vpop.trf.xlu0
        %v415 = vpop.trf.xlu0
        %v416 = vpop.trf.xlu0
        %v417 = vpop.trf.xlu0
        %v418 = vpop.trf.xlu0
        %v419 = vpop.trf.xlu0
        %v420 = vpop.trf.xlu0
        %v421 = vpop.trf.xlu0
        %v422 = vpop.trf.xlu0
        %v423 = vpop.trf.xlu0
        %v424 = vpop.trf.xlu0
        %v425 = vpop.trf.xlu0
        %v426 = vmul.f32 %v410, 0.35355338
        %v427 = vmul.f32 %v411, 0.35355338
        %v428 = vld [vmem:[%s268] sm:$0xff]
        %vm429 = vcmask 64512
        %v431 = vsel %vm429, %v426, 0
        %v434 = vsel %vm429, %v427, 0
        %436 = vmatpush.msra.mxu0 0.0
        %437 = vmatpush.msra.mxu0 0.0
        %438 = vmatpush.msra.mxu0 0.0
        %439 = vmatpush.msra.mxu0 0.0
        %440 = vmatpush.msra.mxu0 0.0
        %441 = vmatpush.msra.mxu0 0.0
        %442 = vmatpush.msra.mxu0 0.0
        %443 = vmatpush.msra.mxu0 0.0
        %444 = vmatpush.msra.mxu0 0.0
        %445 = vmatpush.msra.mxu0 0.0
        %446 = vmatpush.msra.mxu0 0.0
        %447 = vmatpush.msra.mxu0 0.0
        %448 = vmatpush.msra.mxu0 0.0
        %449 = vmatpush.msra.mxu0 0.0
        %450 = vmatpush.msra.mxu0 0.0
        %451 = vmatpush.msra.mxu0 %v428
        %452 = vmatmul.f32.gmra.mxu0 %v431
        %v453 = vpop.f32.mrf.mxu0
        %v454 = vadd.f32 0.0, %v453
        %455 = vmatmul.f32.gmra.mxu0 %v434
        %v456 = vpop.f32.mrf.mxu0
        %v457 = vadd.f32 0.0, %v456
        %458 = vdwg.mxu0
        %vm459 = vcmask 130048
        %v460 = vsel %vm459, %v454, -inf
        %461 = vmax.xlane.f32.xlu0 %v460
        %v462 = vpop.xlane.xlu0 %461
        %v463 = vsel %vm459, %v457, -inf
        %464 = vmax.xlane.f32.xlu0 %v463
        %v465 = vpop.xlane.xlu0 %464
        %v466 = vsub.f32 %v454, %v462
        %v467 = vsub.f32 %v457, %v465
        %v468 = vmul.f32 %v466, 1.442695
        %v469 = vpow.pop %v468
        %v470 = vmul.f32 %v467, 1.442695
        %v471 = vpow.pop %v470
        %v473 = vsel %vm459, %v469, 0
        %v476 = vsel %vm459, %v471, 0
        %478 = vmatpush.msra.mxu0 0.0
        %479 = vmatpush.msra.mxu0 0.0
        %480 = vmatpush.msra.mxu0 0.0
        %481 = vmatpush.msra.mxu0 0.0
        %482 = vmatpush.msra.mxu0 0.0
        %483 = vmatpush.msra.mxu0 0.0
        %484 = vmatpush.msra.mxu0 0.0
        %485 = vmatpush.msra.mxu0 0.0
        %486 = vmatpush.msra.mxu0 0.0
        %487 = vmatpush.msra.mxu0 0.0
        %488 = vmatpush.msra.mxu0 0.0
        %489 = vmatpush.msra.mxu0 0.0
        %490 = vmatpush.msra.mxu0 0.0
        %491 = vmatpush.msra.mxu0 0.0
        %492 = vmatpush.msra.mxu0 1.0
        %493 = vmatpush.msra.mxu0 1.0
        %494 = vmatmul.f32.gmra.mxu0 %v473
        %v495 = vpop.f32.mrf.mxu0
        %v496 = vadd.f32 0.0, %v495
        %497 = vmatmul.f32.gmra.mxu0 %v476
        %v498 = vpop.f32.mrf.mxu0
        %v499 = vadd.f32 0.0, %v498
        %500 = vdwg.mxu0
        %v501 = vld [vmem:[#allocation2] sm:$0xff]
        %v502 = vld [vmem:[#allocation2 + $0x8] sm:$0xff]
        %503 = vmatpush.msra.mxu0 0.0
        %504 = vmatpush.msra.mxu0 0.0
        %505 = vmatpush.msra.mxu0 0.0
        %506 = vmatpush.msra.mxu0 0.0
        %507 = vmatpush.msra.mxu0 0.0
        %508 = vmatpush.msra.mxu0 0.0
        %509 = vmatpush.msra.mxu0 0.0
        %510 = vmatpush.msra.mxu0 0.0
        %511 = vmatpush.msra.mxu0 0.0
        %512 = vmatpush.msra.mxu0 0.0
        %513 = vmatpush.msra.mxu0 0.0
        %514 = vmatpush.msra.mxu0 0.0
        %515 = vmatpush.msra.mxu0 0.0
        %516 = vmatpush.msra.mxu0 0.0
        %517 = vmatpush.msra.mxu0 %v502
        %518 = vmatpush.msra.mxu0 %v501
        %519 = vmatmul.f32.gmra.mxu0 %v473
        %v520 = vpop.f32.mrf.mxu0
        %v521 = vadd.f32 0.0, %v520
        %522 = vmatmul.f32.gmra.mxu0 %v476
        %v523 = vpop.f32.mrf.mxu0
        %v524 = vadd.f32 0.0, %v523
        %525 = vdwg.mxu0
        %v526 = vrcp.pop %v496
        %v527 = vmul.f32 %v496, %v526
        %v528 = vsub.f32 1.0, %v527
        %v529 = vmul.f32 %v526, %v528
        %v530 = vadd.f32 %v526, %v529
        %vm531 = vweird.f32 %v496
        %vm532 = vweird.f32 %v526
        %vm533 = vmor %vm531, %vm532
        %v534 = vsel %vm533, %v526, %v530
        %v535 = vand.u32 2147483647, %v496
        %vm536 = vcmp.eq.f32.partialorder %v535, 8.507059e+37
        %v537 = vand.u32 %v496, 2147483648
        %v538 = vor.u32 1.1754944e-38, %v537
        %v539 = vsel %vm536, %v538, %v534
        %v540 = vrcp.pop %v499
        %v541 = vmul.f32 %v499, %v540
        %v542 = vsub.f32 1.0, %v541
        %v543 = vmul.f32 %v540, %v542
        %v544 = vadd.f32 %v540, %v543
        %vm545 = vweird.f32 %v499
        %vm546 = vweird.f32 %v540
        %vm547 = vmor %vm545, %vm546
        %v548 = vsel %vm547, %v540, %v544
        %v549 = vand.u32 2147483647, %v499
        %vm550 = vcmp.eq.f32.partialorder %v549, 8.507059e+37
        %v551 = vand.u32 %v499, 2147483648
        %v552 = vor.u32 1.1754944e-38, %v551
        %v553 = vsel %vm550, %v552, %v548
        %555 = vset.pattern.permute.xlu0 0
        %556 = vperm.xlu0 %555, %v539
        %v557 = vpop.permute.xlu0 %556
        %560 = vset.pattern.permute.xlu0 0
        %561 = vperm.xlu0 %560, %v553
        %v562 = vpop.permute.xlu0 %561
        %v564 = vmul.f32 %v521, %v557
        %v565 = vmul.f32 %v524, %v562
        %566 = vxpose.xlu0.b32.start [1/16] %v564, 128
        %567 = vxpose.xlu0.b32.cont [2/16] %v565, 128
        %568 = vxpose.xlu0.b32.cont [3/16] 0.0, 128
        %569 = vxpose.xlu0.b32.cont [4/16] 0.0, 128
        %570 = vxpose.xlu0.b32.cont [5/16] 0.0, 128
        %571 = vxpose.xlu0.b32.cont [6/16] 0.0, 128
        %572 = vxpose.xlu0.b32.cont [7/16] 0.0, 128
        %573 = vxpose.xlu0.b32.cont [8/16] 0.0, 128
        %574 = vxpose.xlu0.b32.cont [9/16] 0.0, 128
        %575 = vxpose.xlu0.b32.cont [10/16] 0.0, 128
        %576 = vxpose.xlu0.b32.cont [11/16] 0.0, 128
        %577 = vxpose.xlu0.b32.cont [12/16] 0.0, 128
        %578 = vxpose.xlu0.b32.cont [13/16] 0.0, 128
        %579 = vxpose.xlu0.b32.cont [14/16] 0.0, 128
        %580 = vxpose.xlu0.b32.cont [15/16] 0.0, 128
        %581 = vxpose.xlu0.b32.end [16/16] 0.0, 128
        %v582 = vpop.trf.xlu0
        %v583 = vpop.trf.xlu0
        %v584 = vpop.trf.xlu0
        %v585 = vpop.trf.xlu0
        %v586 = vpop.trf.xlu0
        %v587 = vpop.trf.xlu0
        %v588 = vpop.trf.xlu0
        %v589 = vpop.trf.xlu0
        %v590 = vpop.trf.xlu0
        %v591 = vpop.trf.xlu0
        %v592 = vpop.trf.xlu0
        %v593 = vpop.trf.xlu0
        %v594 = vpop.trf.xlu0
        %v595 = vpop.trf.xlu0
        %v596 = vpop.trf.xlu0
        %v597 = vpop.trf.xlu0
        %598 = vst.msk [vmem:[%s311] sm:$0xff] %vm459, %v582
        %s599 = scalar_lea.vmem %s258, 8 [#allocation3]
        %v600 = vld [vmem:[%s599] sm:$0xff]
        %601 = vxpose.xlu0.b32.start [1/16] %v600, 128
        %602 = vxpose.xlu0.b32.cont [2/16] 0.0, 128
        %603 = vxpose.xlu0.b32.cont [3/16] 0.0, 128
        %604 = vxpose.xlu0.b32.cont [4/16] 0.0, 128
        %605 = vxpose.xlu0.b32.cont [5/16] 0.0, 128
        %606 = vxpose.xlu0.b32.cont [6/16] 0.0, 128
        %607 = vxpose.xlu0.b32.cont [7/16] 0.0, 128
        %608 = vxpose.xlu0.b32.cont [8/16] 0.0, 128
        %609 = vxpose.xlu0.b32.cont [9/16] 0.0, 128
        %610 = vxpose.xlu0.b32.cont [10/16] 0.0, 128
        %611 = vxpose.xlu0.b32.cont [11/16] 0.0, 128
        %612 = vxpose.xlu0.b32.cont [12/16] 0.0, 128
        %613 = vxpose.xlu0.b32.cont [13/16] 0.0, 128
        %614 = vxpose.xlu0.b32.cont [14/16] 0.0, 128
        %615 = vxpose.xlu0.b32.cont [15/16] 0.0, 128
        %616 = vxpose.xlu0.b32.end [16/16] 0.0, 128
        %v617 = vpop.trf.xlu0
        %v618 = vpop.trf.xlu0
        %v619 = vpop.trf.xlu0
        %v620 = vpop.trf.xlu0
        %v621 = vpop.trf.xlu0
        %v622 = vpop.trf.xlu0
        %v623 = vpop.trf.xlu0
        %v624 = vpop.trf.xlu0
        %v625 = vpop.trf.xlu0
        %v626 = vpop.trf.xlu0
        %v627 = vpop.trf.xlu0
        %v628 = vpop.trf.xlu0
        %v629 = vpop.trf.xlu0
        %v630 = vpop.trf.xlu0
        %v631 = vpop.trf.xlu0
        %v632 = vpop.trf.xlu0
        %v633 = vmul.f32 %v617, 0.35355338
        %v634 = vmul.f32 %v618, 0.35355338
        %s635 = scalar_lea.vmem %s268, 8 [#allocation6]
        %v636 = vld [vmem:[%s635] sm:$0xff]
        %v638 = vsel %vm429, %v633, 0
        %v641 = vsel %vm429, %v634, 0
        %643 = vmatpush.msra.mxu0 0.0
        %644 = vmatpush.msra.mxu0 0.0
        %645 = vmatpush.msra.mxu0 0.0
        %646 = vmatpush.msra.mxu0 0.0
        %647 = vmatpush.msra.mxu0 0.0
        %648 = vmatpush.msra.mxu0 0.0
        %649 = vmatpush.msra.mxu0 0.0
        %650 = vmatpush.msra.mxu0 0.0
        %651 = vmatpush.msra.mxu0 0.0
        %652 = vmatpush.msra.mxu0 0.0
        %653 = vmatpush.msra.mxu0 0.0
        %654 = vmatpush.msra.mxu0 0.0
        %655 = vmatpush.msra.mxu0 0.0
        %656 = vmatpush.msra.mxu0 0.0
        %657 = vmatpush.msra.mxu0 0.0
        %658 = vmatpush.msra.mxu0 %v636
        %659 = vmatmul.f32.gmra.mxu0 %v638
        %v660 = vpop.f32.mrf.mxu0
        %v661 = vadd.f32 0.0, %v660
        %662 = vmatmul.f32.gmra.mxu0 %v641
        %v663 = vpop.f32.mrf.mxu0
        %v664 = vadd.f32 0.0, %v663
        %665 = vdwg.mxu0
        %v666 = vsel %vm459, %v661, -inf
        %667 = vmax.xlane.f32.xlu0 %v666
        %v668 = vpop.xlane.xlu0 %667
        %v669 = vsel %vm459, %v664, -inf
        %670 = vmax.xlane.f32.xlu0 %v669
        %v671 = vpop.xlane.xlu0 %670
        %v672 = vsub.f32 %v661, %v668
        %v673 = vsub.f32 %v664, %v671
        %v674 = vmul.f32 %v672, 1.442695
        %v675 = vpow.pop %v674
        %v676 = vmul.f32 %v673, 1.442695
        %v677 = vpow.pop %v676
        %v679 = vsel %vm459, %v675, 0
        %v682 = vsel %vm459, %v677, 0
        %684 = vmatpush.msra.mxu0 0.0
        %685 = vmatpush.msra.mxu0 0.0
        %686 = vmatpush.msra.mxu0 0.0
        %687 = vmatpush.msra.mxu0 0.0
        %688 = vmatpush.msra.mxu0 0.0
        %689 = vmatpush.msra.mxu0 0.0
        %690 = vmatpush.msra.mxu0 0.0
        %691 = vmatpush.msra.mxu0 0.0
        %692 = vmatpush.msra.mxu0 0.0
        %693 = vmatpush.msra.mxu0 0.0
        %694 = vmatpush.msra.mxu0 0.0
        %695 = vmatpush.msra.mxu0 0.0
        %696 = vmatpush.msra.mxu0 0.0
        %697 = vmatpush.msra.mxu0 0.0
        %698 = vmatpush.msra.mxu0 1.0
        %699 = vmatpush.msra.mxu0 1.0
        %700 = vmatmul.f32.gmra.mxu0 %v679
        %v701 = vpop.f32.mrf.mxu0
        %v702 = vadd.f32 0.0, %v701
        %703 = vmatmul.f32.gmra.mxu0 %v682
        %v704 = vpop.f32.mrf.mxu0
        %v705 = vadd.f32 0.0, %v704
        %706 = vdwg.mxu0
        %s707 = scalar_lea.vmem [#allocation2], 16
        %v708 = vld [vmem:[%s707] sm:$0xff]
        %v709 = vld [vmem:[%s707 + $0x8] sm:$0xff]
        %710 = vmatpush.msra.mxu0 0.0
        %711 = vmatpush.msra.mxu0 0.0
        %712 = vmatpush.msra.mxu0 0.0
        %713 = vmatpush.msra.mxu0 0.0
        %714 = vmatpush.msra.mxu0 0.0
        %715 = vmatpush.msra.mxu0 0.0
        %716 = vmatpush.msra.mxu0 0.0
        %717 = vmatpush.msra.mxu0 0.0
        %718 = vmatpush.msra.mxu0 0.0
        %719 = vmatpush.msra.mxu0 0.0
        %720 = vmatpush.msra.mxu0 0.0
        %721 = vmatpush.msra.mxu0 0.0
        %722 = vmatpush.msra.mxu0 0.0
        %723 = vmatpush.msra.mxu0 0.0
        %724 = vmatpush.msra.mxu0 %v709
        %725 = vmatpush.msra.mxu0 %v708
        %726 = vmatmul.f32.gmra.mxu0 %v679
        %v727 = vpop.f32.mrf.mxu0
        %v728 = vadd.f32 0.0, %v727
        %729 = vmatmul.f32.gmra.mxu0 %v682
        %v730 = vpop.f32.mrf.mxu0
        %v731 = vadd.f32 0.0, %v730
        %732 = vdwg.mxu0
        %v733 = vrcp.pop %v702
        %v734 = vmul.f32 %v702, %v733
        %v735 = vsub.f32 1.0, %v734
        %v736 = vmul.f32 %v733, %v735
        %v737 = vadd.f32 %v733, %v736
        %vm738 = vweird.f32 %v702
        %vm739 = vweird.f32 %v733
        %vm740 = vmor %vm738, %vm739
        %v741 = vsel %vm740, %v733, %v737
        %v742 = vand.u32 2147483647, %v702
        %vm743 = vcmp.eq.f32.partialorder %v742, 8.507059e+37
        %v744 = vand.u32 %v702, 2147483648
        %v745 = vor.u32 1.1754944e-38, %v744
        %v746 = vsel %vm743, %v745, %v741
        %v747 = vrcp.pop %v705
        %v748 = vmul.f32 %v705, %v747
        %v749 = vsub.f32 1.0, %v748
        %v750 = vmul.f32 %v747, %v749
        %v751 = vadd.f32 %v747, %v750
        %vm752 = vweird.f32 %v705
        %vm753 = vweird.f32 %v747
        %vm754 = vmor %vm752, %vm753
        %v755 = vsel %vm754, %v747, %v751
        %v756 = vand.u32 2147483647, %v705
        %vm757 = vcmp.eq.f32.partialorder %v756, 8.507059e+37
        %v758 = vand.u32 %v705, 2147483648
        %v759 = vor.u32 1.1754944e-38, %v758
        %v760 = vsel %vm757, %v759, %v755
        %762 = vset.pattern.permute.xlu0 0
        %763 = vperm.xlu0 %762, %v746
        %v764 = vpop.permute.xlu0 %763
        %767 = vset.pattern.permute.xlu0 0
        %768 = vperm.xlu0 %767, %v760
        %v769 = vpop.permute.xlu0 %768
        %v771 = vmul.f32 %v728, %v764
        %v772 = vmul.f32 %v731, %v769
        %773 = vxpose.xlu0.b32.start [1/16] %v771, 128
        %774 = vxpose.xlu0.b32.cont [2/16] %v772, 128
        %775 = vxpose.xlu0.b32.cont [3/16] 0.0, 128
        %776 = vxpose.xlu0.b32.cont [4/16] 0.0, 128
        %777 = vxpose.xlu0.b32.cont [5/16] 0.0, 128
        %778 = vxpose.xlu0.b32.cont [6/16] 0.0, 128
        %779 = vxpose.xlu0.b32.cont [7/16] 0.0, 128
        %780 = vxpose.xlu0.b32.cont [8/16] 0.0, 128
        %781 = vxpose.xlu0.b32.cont [9/16] 0.0, 128
        %782 = vxpose.xlu0.b32.cont [10/16] 0.0, 128
        %783 = vxpose.xlu0.b32.cont [11/16] 0.0, 128
        %784 = vxpose.xlu0.b32.cont [12/16] 0.0, 128
        %785 = vxpose.xlu0.b32.cont [13/16] 0.0, 128
        %786 = vxpose.xlu0.b32.cont [14/16] 0.0, 128
        %787 = vxpose.xlu0.b32.cont [15/16] 0.0, 128
        %788 = vxpose.xlu0.b32.end [16/16] 0.0, 128
        %v789 = vpop.trf.xlu0
        %v790 = vpop.trf.xlu0
        %v791 = vpop.trf.xlu0
        %v792 = vpop.trf.xlu0
        %v793 = vpop.trf.xlu0
        %v794 = vpop.trf.xlu0
        %v795 = vpop.trf.xlu0
        %v796 = vpop.trf.xlu0
        %v797 = vpop.trf.xlu0
        %v798 = vpop.trf.xlu0
        %v799 = vpop.trf.xlu0
        %v800 = vpop.trf.xlu0
        %v801 = vpop.trf.xlu0
        %v802 = vpop.trf.xlu0
        %v803 = vpop.trf.xlu0
        %v804 = vpop.trf.xlu0
        %s805 = scalar_lea.vmem %s311, 8 [#allocation9]
        %806 = vst.msk [vmem:[%s805] sm:$0xff] %vm459, %v789
        %s807 = sand.u32 %s140, 1
        %s808 = scalar_lea.sflag [#allocation5], %s807
        %s809 = sand.u32 %s140, 1
        %s810 = smul.addr %s809, 16
        %s811 = scalar_lea.vmem [#allocation9], %s810
        // Predicated region
        $region49: #{tpu_custom_call.1} parent=31 // pred_check
          %p812 = pneg %p150
        $region50: #{tpu_custom_call.1} parent=31 // pred_check_branch
          %814 = sbr.rel (%p812) target = $region52
        $region51: #{tpu_custom_call.1} parent=31 // pred_region
          %s815 = smul.u32 2, %s29
          %817 = vsyncadd %s808, 0
          %s818 = sadd.s32 %s30, %s815
          %s819 = smul.addr %s28, 2
          %s820 = sadd.s32 %s818, %s819
          %s821 = smul.addr %s820, 8
          %s822 = scalar_lea.hbm %s3, %s821
          %s823 = sshll.u32 %s811, 4
          %s824 = int_to_ptr.vmem [resolvable:$true] %s823
          %s825 = sshll.u32 %s822, 4
          %s826 = int_to_ptr.hbm [resolvable:$true] %s825
          %831 = dma.vmem_to_hbm [thread:$0]  %s824, 256, %s826, %s808, 128, 128, 8
        $region52: #{tpu_custom_call.1} parent=31 // pred_fallthru
          _
      $region32: #{tpu_custom_call.1} parent=5 // pred_fallthru
        _
      %p832 = scmp.le.s32.totalorder 2, %s18
      // Predicated region
      $region53: #{tpu_custom_call.1} parent=5 // pred_check
        %p833 = pneg %p832
      $region54: #{tpu_custom_call.1} parent=5 // pred_check_branch
        %835 = sbr.rel (%p833) target = $region56
      $region55: #{tpu_custom_call.1} parent=5 // pred_region
        %s836 = ssub.s32 %s18, 2
        // Predicated region
        $region57: #{tpu_custom_call.1} parent=55 // pred_check
          %p837 = pneg %p156
        $region58: #{tpu_custom_call.1} parent=55 // pred_check_branch
          %839 = sbr.rel (%p837) target = $region60
        $region59: #{tpu_custom_call.1} parent=55 // pred_region
          %s840 = sand.u32 %s141, 1
          %s841 = scalar_lea.sflag [#allocation5], %s840
          %s842 = sand.u32 %s141, 1
          %s843 = smul.addr %s842, 16
          %s844 = scalar_lea.vmem [#allocation9], %s843
          %846 = dma.done %s841, 256
        $region60: #{tpu_custom_call.1} parent=55 // pred_fallthru
          _
      $region56: #{tpu_custom_call.1} parent=5 // pred_fallthru
        _
    $region6: #{tpu_custom_call.1} parent=1 // loop_footer
      %s22 = sadd.s32 1, %s18
    $region7: #{tpu_custom_call.1} parent=1 // loop_footer_branch
      %17 = sbr.rel target = $region3
    $region8: #{tpu_custom_call.1} parent=1 // loop_exit
      _
    %847 = vsyncpa [#allocation4], 1
    %s848 = scalar_lea.sflag [#allocation4], 1
    %849 = vsyncpa %s848, 1
    %850 = vsyncpa [#allocation7], 1
    %s851 = scalar_lea.sflag [#allocation7], 1
    %852 = vsyncpa %s851, 1
    %853 = vsyncpa [#allocation5], 1
    %s854 = scalar_lea.sflag [#allocation5], 1
    %855 = vsyncpa %s854, 1

</llo_original>
